<compile_context>
chip_gen: v7x
topology: tpu7x:2x2x1
jax: 0.10.0
libtpu: 0.0.40
codegen_flags: <defaults>
</compile_context>

<pallas_src>
import jax
import jax.numpy as jnp
from jax.experimental import pallas as pl
from jax.experimental.pallas import tpu as pltpu


# ----------------------------------------------------------------------------
# helpers
# ----------------------------------------------------------------------------
def _round_up(x, m):
    return (x + m - 1) // m * m


def _pad2d(a, rows, cols):
    return jnp.pad(a, ((0, rows - a.shape[0]), (0, cols - a.shape[1])))


def _pick_rows(b):
    """Image-row padding (bf16 sublane pack = 16) and row-tile size (<=256)."""
    bp = _round_up(max(b, 16), 16)
    if bp <= 256:
        return bp, bp
    bp = _round_up(bp, 256)
    return bp, 256


def _pick_k(k):
    """Padded contraction length (128-aligned) and the largest K tile that
    divides it: big K tiles amortize the ~0.35 us/grid-step overhead."""
    kp = _round_up(k, 128)
    for cand in (2048, 1024, 512, 256, 128):
        if kp % cand == 0:
            return kp, cand
    return kp, 128      # unreachable: kp is always a multiple of 128


def _vmem_budget(need_bytes):
    # Cap well below v7x's 64 MiB physical VMEM to leave Mosaic headroom.
    return int(min(48 * 2**20, max(32 * 2**20, 2 * need_bytes)))


# ----------------------------------------------------------------------------
# kernel 1: text projection (K-tiled) + fused L2 norm, emitted as (D, N)
# ----------------------------------------------------------------------------
def _txt_project_kernel(xT_ref, wT_ref, outT_ref):
    k = pl.program_id(0)

    @pl.when(k == 0)
    def _init():
        outT_ref[...] = jnp.zeros_like(outT_ref)

    # (D, tk) @ (tk, N) -> (D, N); f32 accumulation directly in the resident
    # output block (its block index never changes across the grid).
    outT_ref[...] += jnp.dot(wT_ref[...], xT_ref[...],
                             preferred_element_type=jnp.float32)

    @pl.when(k == pl.num_programs(0) - 1)
    def _finalize():
        feats = outT_ref[...]
        sumsq = jnp.sum(feats * feats, axis=0, keepdims=True)   # per text row
        outT_ref[...] = feats * jax.lax.rsqrt(sumsq + 1e-12)


def _txt_project_normalize(xT, wT, *, tk):
    kp, n = xT.shape        # (K, N) bf16
    d, _ = wT.shape         # (D, K) bf16
    need = 2 * 2 * (tk * n + d * tk) + 2 * 4 * d * n
    return pl.pallas_call(
        _txt_project_kernel,
        out_shape=jax.ShapeDtypeStruct((d, n), jnp.float32),
        grid=(kp // tk,),
        in_specs=[
            pl.BlockSpec((tk, n), lambda kk: (kk, 0)),      # x^T tile
            pl.BlockSpec((d, tk), lambda kk: (0, kk)),      # w^T tile
        ],
        out_specs=pl.BlockSpec((d, n), lambda kk: (0, 0)),
        compiler_params=pltpu.CompilerParams(
            dimension_semantics=("arbitrary",),
            vmem_limit_bytes=_vmem_budget(need)),
    )(xT, wT)


# ----------------------------------------------------------------------------
# kernel 2: image projection (K-tiled) + fused L2 norm (+ scale fold)
#           + fused cosine-similarity logits against resident txt_n^T
# ----------------------------------------------------------------------------
def _img_project_logits_kernel(scale_ref, x_ref, w_ref, txtT_ref, out_ref,
                               acc_ref):
    k = pl.program_id(1)

    @pl.when(k == 0)
    def _init():
        acc_ref[...] = jnp.zeros_like(acc_ref)

    # bf16 x bf16 -> f32 accumulation on the MXU.
    acc_ref[...] += jnp.dot(x_ref[...], w_ref[...],
                            preferred_element_type=jnp.float32)

    @pl.when(k == pl.num_programs(1) - 1)
    def _finalize():
        feats = acc_ref[...]                                   # (tm, D) f32
        sumsq = jnp.sum(feats * feats, axis=-1, keepdims=True)
        inv = jax.lax.rsqrt(sumsq + 1e-12) * scale_ref[0]      # scale folded
        img_n = feats * inv
        # Fused logits: plain NN matmul against the pre-transposed (D, N)
        # normalized text features -> no transpose in or around the kernel;
        # output last dim is a 128-multiple -> lane-dense unmasked stores.
        out_ref[...] = jnp.dot(img_n, txtT_ref[...],
                               preferred_element_type=jnp.float32)


def _img_project_logits(scale, x, w, txt_nT, *, tm, tk):
    m, kp = x.shape
    _, d = w.shape
    _, n = txt_nT.shape
    need = (2 * 2 * (tm * tk + tk * d)    # double-buffered bf16 x / w tiles
            + 2 * 4 * d * n               # resident f32 txt^T block
            + 2 * 4 * tm * n              # f32 logits tile
            + 4 * tm * d)                 # f32 accumulator scratch
    return pl.pallas_call(
        _img_project_logits_kernel,
        out_shape=jax.ShapeDtypeStruct((m, n), jnp.float32),
        grid=(m // tm, kp // tk),
        in_specs=[
            pl.BlockSpec((1,), lambda i, kk: (0,),
                         memory_space=pltpu.MemorySpace.SMEM),   # logit scale
            pl.BlockSpec((tm, tk), lambda i, kk: (i, kk)),        # image acts
            pl.BlockSpec((tk, d), lambda i, kk: (kk, 0)),         # image W
            pl.BlockSpec((d, n), lambda i, kk: (0, 0)),           # txt_n^T
        ],
        out_specs=pl.BlockSpec((tm, n), lambda i, kk: (i, 0)),
        scratch_shapes=[pltpu.VMEM((tm, d), jnp.float32)],
        compiler_params=pltpu.CompilerParams(
            dimension_semantics=("parallel", "arbitrary"),
            vmem_limit_bytes=_vmem_budget(need)),
    )(scale, x, w, txt_nT)


# ----------------------------------------------------------------------------
# one-time parameter preparation (hoisted out of the per-call forward)
# ----------------------------------------------------------------------------
def prepare_params(raw):
    """Pad + bf16-cast the projection weights once. Stage-1 HBM traffic is
    dominated by these reads, so re-padding/casting per call is avoided."""
    w_img = jnp.asarray(raw["w_img"], jnp.float32)
    w_txt = jnp.asarray(raw["w_txt"], jnp.float32)
    d_pad = _round_up(w_img.shape[1], 128)
    ki_pad, _ = _pick_k(w_img.shape[0])
    kt_pad, _ = _pick_k(w_txt.shape[0])
    return {
        # (K_i, D) bf16, padded once
        "w_img": _pad2d(w_img, ki_pad, d_pad).astype(jnp.bfloat16),
        # (D, K_t) bf16, pre-transposed so the text kernel emits txt_n in
        # (D, N) layout and no transpose is ever materialized.
        "w_txtT": jnp.transpose(
            _pad2d(w_txt, kt_pad, d_pad)).astype(jnp.bfloat16),
        "tok_emb": jnp.asarray(raw["tok_emb"], jnp.float32),
        "logit_scale": jnp.asarray(raw["logit_scale"], jnp.float32).reshape(1),
    }


# ----------------------------------------------------------------------------
# Wrapper emulating model_cliptqn.forward(image, text, clip_model)
# ----------------------------------------------------------------------------
def model_cliptqn_forward(image, text_ids, params):
    """image: [B, C, H, W] f32 (NCHW); text_ids: [B, T] int32."""
    b = image.shape[0]
    w_img = params["w_img"]            # (K_i, D) bf16, prepared
    w_txtT = params["w_txtT"]          # (D, K_t) bf16, prepared
    ki_pad, d_pad = w_img.shape
    kt_pad = w_txtT.shape[1]
    _, tk_i = _pick_k(ki_pad)
    _, tk_t = _pick_k(kt_pad)

    # Encoder front-ends (XLA glue): torch-style row-major flatten, and
    # token-embedding lookup + mean pool over the sequence.
    x_img = image.reshape(b, -1).astype(jnp.float32)
    x_txt = jnp.mean(jnp.take(params["tok_emb"], text_ids, axis=0), axis=1)

    # Image rows -> multiple of 16 (bf16 sublane pack); text rows -> multiple
    # of 128 since they become the lane dimension of the logits output.
    m_pad, tm = _pick_rows(b)
    n_pad = _round_up(max(b, 128), 128)

    x_img_p = _pad2d(x_img, m_pad, ki_pad).astype(jnp.bfloat16)
    x_txtT_p = jnp.transpose(_pad2d(x_txt, n_pad, kt_pad)).astype(jnp.bfloat16)

    # Kernel 1: text projection + L2 norm, emitted pre-transposed (D, N).
    txt_nT = _txt_project_normalize(x_txtT_p, w_txtT, tk=tk_t)

    # Kernel 2: image projection + L2 norm (logit scale folded) + fused
    # cosine-similarity logits against the resident txt_n^T block.
    logits_pad = _img_project_logits(params["logit_scale"], x_img_p, w_img,
                                     txt_nT, tm=tm, tk=tk_i)

    logits_per_image = logits_pad[:b, :b]
    logits_per_text = logits_per_image.T      # free in XLA; no in-kernel XLU
    return logits_per_image, logits_per_text


# TODO(synk): TQN_Model (forward_tqn path) is not defined in the provided
# source; only the primary forward (CLIP logits) is implemented here.

if __name__ == "__main__":
    # small shapes consistent with the forward signature
    B, C, H, W = 2, 4, 16, 16          # image  [2, 4, 16, 16]
    T, V = 8, 64                       # text   [2, 8] token ids, vocab 64
    F_TXT, D = 32, 64                  # text emb width 32, embed_dim 64

    key = jax.random.PRNGKey(0)
    k_img, k_txt, k_wimg, k_wtxt, k_emb = jax.random.split(key, 5)

    image = jax.random.normal(k_img, (B, C, H, W), dtype=jnp.float32)
    text_ids = jax.random.randint(k_txt, (B, T), 0, V, dtype=jnp.int32)

    F_IMG = C * H * W
    raw_params = {
        "w_img": jax.random.normal(k_wimg, (F_IMG, D), jnp.float32)
                 * (1.0 / jnp.sqrt(F_IMG)),
        "w_txt": jax.random.normal(k_wtxt, (F_TXT, D), jnp.float32)
                 * (1.0 / jnp.sqrt(F_TXT)),
        "tok_emb": jax.random.normal(k_emb, (V, F_TXT), jnp.float32) * 0.02,
        # CLIP logit scale = exp(log(1/0.07))
        "logit_scale": jnp.array([1.0 / 0.07], dtype=jnp.float32),
    }

    params = prepare_params(raw_params)   # one-time pad + bf16 cast (hoisted)

    logits_per_image, logits_per_text = jax.jit(model_cliptqn_forward)(
        image, text_ids, params)
    jax.block_until_ready((logits_per_image, logits_per_text))

    assert logits_per_image.shape == (B, B)
    assert logits_per_text.shape == (B, B)
    assert bool(jnp.all(jnp.isfinite(logits_per_image)))
    assert bool(jnp.allclose(logits_per_image, logits_per_text.T))

    # pure-JAX f32 reference parity check (bf16 MXU path -> loose tolerance)
    img_f = image.reshape(B, -1) @ raw_params["w_img"]
    txt_f = jnp.mean(jnp.take(raw_params["tok_emb"], text_ids, axis=0),
                     axis=1) @ raw_params["w_txt"]
    img_f = img_f / jnp.linalg.norm(img_f, axis=1, keepdims=True)
    txt_f = txt_f / jnp.linalg.norm(txt_f, axis=1, keepdims=True)
    ref = raw_params["logit_scale"][0] * img_f @ txt_f.T
    assert bool(jnp.allclose(logits_per_image, ref, atol=0.5, rtol=0.05))

    print("KERNEL_OK")
</pallas_src>

<mosaic_0001>
module attributes {stable_mosaic.version = 11 : i64} {
  func.func @_txt_project_kernel(%arg0: i32, %arg1: memref<128x128xbf16, #tpu.memory_space<vmem>>, %arg2: memref<128x128xbf16, #tpu.memory_space<vmem>>, %arg3: memref<128x128xf32, #tpu.memory_space<vmem>>) attributes {dimension_semantics = [#tpu.dimension_semantics<arbitrary>], iteration_bounds = array<i64: 1>, scalar_prefetch = 0 : i64, scratch_operands = 0 : i64, tpu.core_type = #tpu.core_type<tc>, window_params = [{transform_indices = @transform_0, window_bounds = array<i64: 128, 128>}, {transform_indices = @transform_1, window_bounds = array<i64: 128, 128>}, {pipeline_mode = #tpu.pipeline_mode<synchronous>, transform_indices = @transform_2, window_bounds = array<i64: 128, 128>}]} {
    %c0_i32 = arith.constant 0 : i32
    %0 = arith.cmpi eq, %arg0, %c0_i32 : i32
    %1 = arith.extui %0 : i1 to i32
    %c0_i32_0 = arith.constant 0 : i32
    %2 = arith.cmpi ne, %1, %c0_i32_0 : i32
    scf.if %2 {
      %cst_10 = arith.constant 0.000000e+00 : f32
      %12 = vector.broadcast %cst_10 : f32 to vector<128x128xf32>
      %c0_11 = arith.constant 0 : index
      %c0_12 = arith.constant 0 : index
      %13 = vector.load %arg3[%c0_11, %c0_12] : memref<128x128xf32, #tpu.memory_space<vmem>>, vector<128x128xf32>
      tpu.vector_store %arg3[%c0_11, %c0_12], %12 {strides = array<i32>} : memref<128x128xf32, #tpu.memory_space<vmem>>, vector<128x128xf32>,
    } else {
    }
    %c0 = arith.constant 0 : index
    %c0_1 = arith.constant 0 : index
    %3 = vector.load %arg3[%c0, %c0_1] : memref<128x128xf32, #tpu.memory_space<vmem>>, vector<128x128xf32>
    %c0_2 = arith.constant 0 : index
    %c0_3 = arith.constant 0 : index
    %4 = vector.load %arg2[%c0_2, %c0_3] : memref<128x128xbf16, #tpu.memory_space<vmem>>, vector<128x128xbf16>
    %c0_4 = arith.constant 0 : index
    %c0_5 = arith.constant 0 : index
    %5 = vector.load %arg1[%c0_4, %c0_5] : memref<128x128xbf16, #tpu.memory_space<vmem>>, vector<128x128xbf16>
    %cst = arith.constant dense<0.000000e+00> : vector<128x128xf32>
    %6 = tpu.matmul %4, %5, %cst {dimension_numbers = #tpu.dot_dimension_numbers<[1], [0], [0], [1], [0, 0, 1, 1], [], []>} : vector<128x128xbf16>, vector<128x128xbf16>, vector<128x128xf32> -> vector<128x128xf32>
    %7 = arith.addf %3, %6 : vector<128x128xf32>
    %c0_6 = arith.constant 0 : index
    %c0_7 = arith.constant 0 : index
    %8 = vector.load %arg3[%c0_6, %c0_7] : memref<128x128xf32, #tpu.memory_space<vmem>>, vector<128x128xf32>
    tpu.vector_store %arg3[%c0_6, %c0_7], %7 {strides = array<i32>} : memref<128x128xf32, #tpu.memory_space<vmem>>, vector<128x128xf32>,
    %c0_i32_8 = arith.constant 0 : i32
    %9 = arith.cmpi eq, %arg0, %c0_i32_8 : i32
    %10 = arith.extui %9 : i1 to i32
    %c0_i32_9 = arith.constant 0 : i32
    %11 = arith.cmpi ne, %10, %c0_i32_9 : i32
    scf.if %11 {
      %c0_10 = arith.constant 0 : index
      %c0_11 = arith.constant 0 : index
      %12 = vector.load %arg3[%c0_10, %c0_11] : memref<128x128xf32, #tpu.memory_space<vmem>>, vector<128x128xf32>
      %13 = arith.mulf %12, %12 : vector<128x128xf32>
      %cst_12 = arith.constant dense<0.000000e+00> : vector<128xf32>
      %14 = vector.multi_reduction <add>, %13, %cst_12 [0] : vector<128x128xf32> to vector<128xf32>
      %15 = vector.shape_cast %14 : vector<128xf32> to vector<1x128xf32>
      %cst_13 = arith.constant 9.99999996E-13 : f32
      %16 = vector.broadcast %cst_13 : f32 to vector<1x128xf32>
      %17 = arith.addf %15, %16 : vector<1x128xf32>
      %18 = math.rsqrt %17 : vector<1x128xf32>
      %19 = vector.broadcast %18 : vector<1x128xf32> to vector<128x128xf32>
      %20 = arith.mulf %12, %19 : vector<128x128xf32>
      %c0_14 = arith.constant 0 : index
      %c0_15 = arith.constant 0 : index
      %21 = vector.load %arg3[%c0_14, %c0_15] : memref<128x128xf32, #tpu.memory_space<vmem>>, vector<128x128xf32>
      tpu.vector_store %arg3[%c0_14, %c0_15], %20 {strides = array<i32>} : memref<128x128xf32, #tpu.memory_space<vmem>>, vector<128x128xf32>,
    } else {
    }
    return
  }
  func.func @transform_0(%arg0: i32) -> (i32, i32) {
    %c0_i32 = arith.constant 0 : i32
    %c0_i32_0 = arith.constant 0 : i32
    return %arg0, %c0_i32 : i32, i32
  }
  func.func @transform_1(%arg0: i32) -> (i32, i32) {
    %c0_i32 = arith.constant 0 : i32
    %c0_i32_0 = arith.constant 0 : i32
    return %c0_i32, %arg0 : i32, i32
  }
  func.func @transform_2(%arg0: i32) -> (i32, i32) {
    %c0_i32 = arith.constant 0 : i32
    %c0_i32_0 = arith.constant 0 : i32
    %c0_i32_1 = arith.constant 0 : i32
    return %c0_i32, %c0_i32_0 : i32, i32
  }
}

module attributes {stable_mosaic.version = 11 : i64} {
  func.func @_img_project_logits_kernel(%arg0: i32, %arg1: i32, %arg2: memref<1xf32, #tpu.memory_space<smem>>, %arg3: memref<16x1024xbf16, #tpu.memory_space<vmem>>, %arg4: memref<1024x128xbf16, #tpu.memory_space<vmem>>, %arg5: memref<128x128xf32, #tpu.memory_space<vmem>>, %arg6: memref<16x128xf32, #tpu.memory_space<vmem>>, %arg7: memref<16x128xf32, #tpu.memory_space<vmem>>) attributes {dimension_semantics = [#tpu.dimension_semantics<parallel>, #tpu.dimension_semantics<arbitrary>], iteration_bounds = array<i64: 1, 1>, scalar_prefetch = 0 : i64, scratch_operands = 1 : i64, tpu.core_type = #tpu.core_type<tc>, window_params = [{transform_indices = @transform_0, window_bounds = array<i64: 1>}, {transform_indices = @transform_1, window_bounds = array<i64: 16, 1024>}, {transform_indices = @transform_2, window_bounds = array<i64: 1024, 128>}, {pipeline_mode = #tpu.pipeline_mode<synchronous>, transform_indices = @transform_3, window_bounds = array<i64: 128, 128>}, {transform_indices = @transform_4, window_bounds = array<i64: 16, 128>}]} {
    %c0_i32 = arith.constant 0 : i32
    %0 = arith.cmpi eq, %arg1, %c0_i32 : i32
    %1 = arith.extui %0 : i1 to i32
    %c0_i32_0 = arith.constant 0 : i32
    %2 = arith.cmpi ne, %1, %c0_i32_0 : i32
    scf.if %2 {
      %cst_10 = arith.constant 0.000000e+00 : f32
      %12 = vector.broadcast %cst_10 : f32 to vector<16x128xf32>
      %c0_11 = arith.constant 0 : index
      %c0_12 = arith.constant 0 : index
      %13 = vector.load %arg7[%c0_11, %c0_12] : memref<16x128xf32, #tpu.memory_space<vmem>>, vector<16x128xf32>
      tpu.vector_store %arg7[%c0_11, %c0_12], %12 {strides = array<i32>} : memref<16x128xf32, #tpu.memory_space<vmem>>, vector<16x128xf32>,
    } else {
    }
    %c0 = arith.constant 0 : index
    %c0_1 = arith.constant 0 : index
    %3 = vector.load %arg7[%c0, %c0_1] : memref<16x128xf32, #tpu.memory_space<vmem>>, vector<16x128xf32>
    %c0_2 = arith.constant 0 : index
    %c0_3 = arith.constant 0 : index
    %4 = vector.load %arg3[%c0_2, %c0_3] : memref<16x1024xbf16, #tpu.memory_space<vmem>>, vector<16x1024xbf16>
    %c0_4 = arith.constant 0 : index
    %c0_5 = arith.constant 0 : index
    %5 = vector.load %arg4[%c0_4, %c0_5] : memref<1024x128xbf16, #tpu.memory_space<vmem>>, vector<1024x128xbf16>
    %cst = arith.constant dense<0.000000e+00> : vector<16x128xf32>
    %6 = tpu.matmul %4, %5, %cst {dimension_numbers = #tpu.dot_dimension_numbers<[1], [0], [0], [1], [0, 0, 1, 1], [], []>} : vector<16x1024xbf16>, vector<1024x128xbf16>, vector<16x128xf32> -> vector<16x128xf32>
    %7 = arith.addf %3, %6 : vector<16x128xf32>
    %c0_6 = arith.constant 0 : index
    %c0_7 = arith.constant 0 : index
    %8 = vector.load %arg7[%c0_6, %c0_7] : memref<16x128xf32, #tpu.memory_space<vmem>>, vector<16x128xf32>
    tpu.vector_store %arg7[%c0_6, %c0_7], %7 {strides = array<i32>} : memref<16x128xf32, #tpu.memory_space<vmem>>, vector<16x128xf32>,
    %c0_i32_8 = arith.constant 0 : i32
    %9 = arith.cmpi eq, %arg1, %c0_i32_8 : i32
    %10 = arith.extui %9 : i1 to i32
    %c0_i32_9 = arith.constant 0 : i32
    %11 = arith.cmpi ne, %10, %c0_i32_9 : i32
    scf.if %11 {
      %c0_10 = arith.constant 0 : index
      %c0_11 = arith.constant 0 : index
      %12 = vector.load %arg7[%c0_10, %c0_11] : memref<16x128xf32, #tpu.memory_space<vmem>>, vector<16x128xf32>
      %13 = arith.mulf %12, %12 : vector<16x128xf32>
      %cst_12 = arith.constant dense<0.000000e+00> : vector<16xf32>
      %14 = vector.multi_reduction <add>, %13, %cst_12 [1] : vector<16x128xf32> to vector<16xf32>
      %15 = vector.shape_cast %14 : vector<16xf32> to vector<16x1xf32>
      %cst_13 = arith.constant 9.99999996E-13 : f32
      %16 = vector.broadcast %cst_13 : f32 to vector<16x1xf32>
      %17 = arith.addf %15, %16 : vector<16x1xf32>
      %18 = math.rsqrt %17 : vector<16x1xf32>
      %c0_14 = arith.constant 0 : index
      %19 = memref.load %arg2[%c0_14] : memref<1xf32, #tpu.memory_space<smem>>
      %20 = vector.broadcast %19 : f32 to vector<16x1xf32>
      %21 = arith.mulf %18, %20 : vector<16x1xf32>
      %22 = vector.broadcast %21 : vector<16x1xf32> to vector<16x128xf32>
      %23 = arith.mulf %12, %22 : vector<16x128xf32>
      %c0_15 = arith.constant 0 : index
      %c0_16 = arith.constant 0 : index
      %24 = vector.load %arg5[%c0_15, %c0_16] : memref<128x128xf32, #tpu.memory_space<vmem>>, vector<128x128xf32>
      %cst_17 = arith.constant dense<0.000000e+00> : vector<16x128xf32>
      %25 = tpu.matmul %23, %24, %cst_17 {dimension_numbers = #tpu.dot_dimension_numbers<[1], [0], [0], [1], [0, 0, 1, 1], [], []>} : vector<16x128xf32>, vector<128x128xf32>, vector<16x128xf32> -> vector<16x128xf32>
      %c0_18 = arith.constant 0 : index
      %c0_19 = arith.constant 0 : index
      %26 = vector.load %arg6[%c0_18, %c0_19] : memref<16x128xf32, #tpu.memory_space<vmem>>, vector<16x128xf32>
      tpu.vector_store %arg6[%c0_18, %c0_19], %25 {strides = array<i32>} : memref<16x128xf32, #tpu.memory_space<vmem>>, vector<16x128xf32>,
    } else {
    }
    return
  }
  func.func @transform_0(%arg0: i32, %arg1: i32) -> i32 {
    %c0_i32 = arith.constant 0 : i32
    %c0_i32_0 = arith.constant 0 : i32
    return %c0_i32 : i32
  }
  func.func @transform_1(%arg0: i32, %arg1: i32) -> (i32, i32) {
    %c0_i32 = arith.constant 0 : i32
    return %arg0, %arg1 : i32, i32
  }
  func.func @transform_2(%arg0: i32, %arg1: i32) -> (i32, i32) {
    %c0_i32 = arith.constant 0 : i32
    %c0_i32_0 = arith.constant 0 : i32
    return %arg1, %c0_i32 : i32, i32
  }
  func.func @transform_3(%arg0: i32, %arg1: i32) -> (i32, i32) {
    %c0_i32 = arith.constant 0 : i32
    %c0_i32_0 = arith.constant 0 : i32
    %c0_i32_1 = arith.constant 0 : i32
    return %c0_i32, %c0_i32_0 : i32, i32
  }
  func.func @transform_4(%arg0: i32, %arg1: i32) -> (i32, i32) {
    %c0_i32 = arith.constant 0 : i32
    %c0_i32_0 = arith.constant 0 : i32
    return %arg0, %c0_i32 : i32, i32
  }
}

</mosaic_0001>

<llo_original>
// kernel: model_cliptqn_forward.2
$region0: #{model_cliptqn_forward.2}
  #allocation0 [shape = 'u32[]', space=smem, size = 0x4, offset = 0x4, fixed_abs, tag = 'smem constant byte address 0x4 - core index']
  #allocation1 [shape = 'u32[144,128]{1,0:T(1,128)}', space=vmem, size = 0x12000, scoped, tag = 'internal scratch']
  %s0 = inlined_call_operand.vmem [shape: bf16[128,128], index: 0, kind: input, shape index: {}]
  %s1 = inlined_call_operand.vmem [shape: bf16[128,128], index: 1, kind: input, shape index: {}]
  %s2 = inlined_call_operand.vmem [shape: f32[128,128], index: 2, kind: output, shape index: {}]
  %s3 = sld [smem:[#allocation0]]
  $region26: #{model_cliptqn_forward.2} parent=0
    _
  %s5 = ssub.s32 1, %s3
  %s6 = scalar_select 0, %s5, %s3
  // Predicated region
  $region2: #{model_cliptqn_forward.2} parent=0 // pred_check
    _
  $region3: #{model_cliptqn_forward.2} parent=0 // pred_check_branch
    %8 = sbr.rel (0) target = $region5
  $region4: #{model_cliptqn_forward.2} parent=0 // pred_region
    _
  $region5: #{model_cliptqn_forward.2} parent=0 // pred_fallthru
    _
  // Predicated region
  $region6: #{model_cliptqn_forward.2} parent=0 // pred_check
    _
  $region7: #{model_cliptqn_forward.2} parent=0 // pred_check_branch
    %10 = sbr.rel (0) target = $region9
  $region8: #{model_cliptqn_forward.2} parent=0 // pred_region
    _
  $region9: #{model_cliptqn_forward.2} parent=0 // pred_fallthru
    _
  %p12 = scmp.eq.s32.totalorder 0, 0
  // Predicated region
  $region10: #{model_cliptqn_forward.2} parent=0 // pred_check
    %p13 = pneg %p12
  $region11: #{model_cliptqn_forward.2} parent=0 // pred_check_branch
    %15 = sbr.rel (%p13) target = $region13
  $region12: #{model_cliptqn_forward.2} parent=0 // pred_region
    %16 = vst [vmem:[%s2] sm:$0xff] 0.0
    %17 = vst [vmem:[%s2 + $0x8] sm:$0xff] 0.0
    %18 = vst [vmem:[%s2 + $0x10] sm:$0xff] 0.0
    %19 = vst [vmem:[%s2 + $0x18] sm:$0xff] 0.0
    %20 = vst [vmem:[%s2 + $0x20] sm:$0xff] 0.0
    %21 = vst [vmem:[%s2 + $0x28] sm:$0xff] 0.0
    %22 = vst [vmem:[%s2 + $0x30] sm:$0xff] 0.0
    %23 = vst [vmem:[%s2 + $0x38] sm:$0xff] 0.0
    %24 = vst [vmem:[%s2 + $0x40] sm:$0xff] 0.0
    %25 = vst [vmem:[%s2 + $0x48] sm:$0xff] 0.0
    %26 = vst [vmem:[%s2 + $0x50] sm:$0xff] 0.0
    %27 = vst [vmem:[%s2 + $0x58] sm:$0xff] 0.0
    %28 = vst [vmem:[%s2 + $0x60] sm:$0xff] 0.0
    %29 = vst [vmem:[%s2 + $0x68] sm:$0xff] 0.0
    %30 = vst [vmem:[%s2 + $0x70] sm:$0xff] 0.0
    %31 = vst [vmem:[%s2 + $0x78] sm:$0xff] 0.0
  $region13: #{model_cliptqn_forward.2} parent=0 // pred_fallthru
    _
  %v32 = vld [vmem:[%s2] sm:$0xff]
  %v33 = vld [vmem:[%s2 + $0x8] sm:$0xff]
  %v34 = vld [vmem:[%s2 + $0x10] sm:$0xff]
  %v35 = vld [vmem:[%s2 + $0x18] sm:$0xff]
  %v36 = vld [vmem:[%s2 + $0x20] sm:$0xff]
  %v37 = vld [vmem:[%s2 + $0x28] sm:$0xff]
  %v38 = vld [vmem:[%s2 + $0x30] sm:$0xff]
  %v39 = vld [vmem:[%s2 + $0x38] sm:$0xff]
  %v40 = vld [vmem:[%s2 + $0x40] sm:$0xff]
  %v41 = vld [vmem:[%s2 + $0x48] sm:$0xff]
  %v42 = vld [vmem:[%s2 + $0x50] sm:$0xff]
  %v43 = vld [vmem:[%s2 + $0x58] sm:$0xff]
  %v44 = vld [vmem:[%s2 + $0x60] sm:$0xff]
  %v45 = vld [vmem:[%s2 + $0x68] sm:$0xff]
  %v46 = vld [vmem:[%s2 + $0x70] sm:$0xff]
  %v47 = vld [vmem:[%s2 + $0x78] sm:$0xff]
  %v48 = vld [vmem:[%s1] sm:$0xf]
  %v49 = vld [vmem:[%s1 + $0x4] sm:$0xf]
  %v50 = vld [vmem:[%s1 + $0x8] sm:$0xf]
  %v51 = vld [vmem:[%s1 + $0xc] sm:$0xf]
  %v52 = vld [vmem:[%s1 + $0x10] sm:$0xf]
  %v53 = vld [vmem:[%s1 + $0x14] sm:$0xf]
  %v54 = vld [vmem:[%s1 + $0x18] sm:$0xf]
  %v55 = vld [vmem:[%s1 + $0x1c] sm:$0xf]
  %v56 = vld [vmem:[%s1 + $0x20] sm:$0xf]
  %v57 = vld [vmem:[%s1 + $0x24] sm:$0xf]
  %v58 = vld [vmem:[%s1 + $0x28] sm:$0xf]
  %v59 = vld [vmem:[%s1 + $0x2c] sm:$0xf]
  %v60 = vld [vmem:[%s1 + $0x30] sm:$0xf]
  %v61 = vld [vmem:[%s1 + $0x34] sm:$0xf]
  %v62 = vld [vmem:[%s1 + $0x38] sm:$0xf]
  %v63 = vld [vmem:[%s1 + $0x3c] sm:$0xf]
  %v64 = vld [vmem:[%s0] sm:$0xf]
  %v65 = vld [vmem:[%s0 + $0x4] sm:$0xf]
  %v66 = vld [vmem:[%s0 + $0x8] sm:$0xf]
  %v67 = vld [vmem:[%s0 + $0xc] sm:$0xf]
  %v68 = vld [vmem:[%s0 + $0x10] sm:$0xf]
  %v69 = vld [vmem:[%s0 + $0x14] sm:$0xf]
  %v70 = vld [vmem:[%s0 + $0x18] sm:$0xf]
  %v71 = vld [vmem:[%s0 + $0x1c] sm:$0xf]
  %v72 = vld [vmem:[%s0 + $0x20] sm:$0xf]
  %v73 = vld [vmem:[%s0 + $0x24] sm:$0xf]
  %v74 = vld [vmem:[%s0 + $0x28] sm:$0xf]
  %v75 = vld [vmem:[%s0 + $0x2c] sm:$0xf]
  %v76 = vld [vmem:[%s0 + $0x30] sm:$0xf]
  %v77 = vld [vmem:[%s0 + $0x34] sm:$0xf]
  %v78 = vld [vmem:[%s0 + $0x38] sm:$0xf]
  %v79 = vld [vmem:[%s0 + $0x3c] sm:$0xf]
  %v96 = vunpack.c.l.b16 %v48
  %v97 = vunpack.c.l.b16 %v49
  %v98 = vunpack.c.l.b16 %v50
  %v99 = vunpack.c.l.b16 %v51
  %v100 = vunpack.c.l.b16 %v52
  %v101 = vunpack.c.l.b16 %v53
  %v102 = vunpack.c.l.b16 %v54
  %v103 = vunpack.c.l.b16 %v55
  %v104 = vunpack.c.l.b16 %v56
  %v105 = vunpack.c.l.b16 %v57
  %v106 = vunpack.c.l.b16 %v58
  %v107 = vunpack.c.l.b16 %v59
  %v108 = vunpack.c.l.b16 %v60
  %v109 = vunpack.c.l.b16 %v61
  %v110 = vunpack.c.l.b16 %v62
  %v111 = vunpack.c.l.b16 %v63
  %v112 = vpack.c.b16 %v97, %v96
  %v113 = vpack.c.b16 %v99, %v98
  %v114 = vpack.c.b16 %v101, %v100
  %v115 = vpack.c.b16 %v103, %v102
  %v116 = vpack.c.b16 %v105, %v104
  %v117 = vpack.c.b16 %v107, %v106
  %v118 = vpack.c.b16 %v109, %v108
  %v119 = vpack.c.b16 %v111, %v110
  %v144 = vunpack.c.l.b16 %v64
  %v145 = vunpack.c.l.b16 %v65
  %v146 = vunpack.c.l.b16 %v66
  %v147 = vunpack.c.l.b16 %v67
  %v148 = vunpack.c.l.b16 %v68
  %v149 = vunpack.c.l.b16 %v69
  %v150 = vunpack.c.l.b16 %v70
  %v151 = vunpack.c.l.b16 %v71
  %v152 = vunpack.c.l.b16 %v72
  %v153 = vunpack.c.l.b16 %v73
  %v154 = vunpack.c.l.b16 %v74
  %v155 = vunpack.c.l.b16 %v75
  %v156 = vunpack.c.l.b16 %v76
  %v157 = vunpack.c.l.b16 %v77
  %v158 = vunpack.c.l.b16 %v78
  %v159 = vunpack.c.l.b16 %v79
  %v160 = vpack.c.b16 %v145, %v144
  %v161 = vpack.c.b16 %v147, %v146
  %v162 = vpack.c.b16 %v149, %v148
  %v163 = vpack.c.b16 %v151, %v150
  %v164 = vpack.c.b16 %v153, %v152
  %v165 = vpack.c.b16 %v155, %v154
  %v166 = vpack.c.b16 %v157, %v156
  %v167 = vpack.c.b16 %v159, %v158
  %176 = vmatprep.subr.bf16.mxu0 0
  %177 = vmatpush1.bf16.msra.mxu0 %v160
  %178 = vmatprep.subr.bf16.mxu0 0
  %179 = vmatpush1.bf16.msra.mxu0 %v161
  %180 = vmatprep.subr.bf16.mxu0 0
  %181 = vmatpush1.bf16.msra.mxu0 %v162
  %182 = vmatprep.subr.bf16.mxu0 0
  %183 = vmatpush1.bf16.msra.mxu0 %v163
  %184 = vmatprep.subr.bf16.mxu0 0
  %185 = vmatpush1.bf16.msra.mxu0 %v164
  %186 = vmatprep.subr.bf16.mxu0 0
  %187 = vmatpush1.bf16.msra.mxu0 %v165
  %188 = vmatprep.subr.bf16.mxu0 0
  %189 = vmatpush1.bf16.msra.mxu0 %v166
  %190 = vmatprep.subr.bf16.mxu0 0
  %191 = vmatpush1.bf16.msra.mxu0 %v167
  %192 = vmatprep.subr.bf16.mxu0 0
  %193 = vmatpush1.bf16.msra.mxu0 0
  %194 = vmatprep.subr.bf16.mxu0 0
  %195 = vmatpush1.bf16.msra.mxu0 0
  %196 = vmatprep.subr.bf16.mxu0 0
  %197 = vmatpush1.bf16.msra.mxu0 0
  %198 = vmatprep.subr.bf16.mxu0 0
  %199 = vmatpush1.bf16.msra.mxu0 0
  %200 = vmatprep.subr.bf16.mxu0 0
  %201 = vmatpush1.bf16.msra.mxu0 0
  %202 = vmatprep.subr.bf16.mxu0 0
  %203 = vmatpush1.bf16.msra.mxu0 0
  %204 = vmatprep.subr.bf16.mxu0 0
  %205 = vmatpush1.bf16.msra.mxu0 0
  %206 = vmatprep.subr.bf16.mxu0 0
  %207 = vmatpush1.bf16.msra.mxu0 0
  %208 = vmatprep.mubr.bf16.mxu0 0
  %209 = vmatmul.mubr.bf16.gmra.mrb[0].mxu0 %v112
  %v210 = vpop.f32.mrb[0].mxu0
  %v211 = vadd.f32 0.0, %v210
  %v212 = vpop.f32.mrb[0].mxu0
  %v213 = vpop.f32.mrb[0].mxu0
  %v214 = vadd.f32 0.0, %v213
  %v215 = vpop.f32.mrb[0].mxu0
  %216 = vmatprep.mubr.bf16.mxu0 0
  %217 = vmatmul.mubr.bf16.gmra.mrb[0].mxu0 %v113
  %v218 = vpop.f32.mrb[0].mxu0
  %v219 = vadd.f32 0.0, %v218
  %v220 = vpop.f32.mrb[0].mxu0
  %v221 = vpop.f32.mrb[0].mxu0
  %v222 = vadd.f32 0.0, %v221
  %v223 = vpop.f32.mrb[0].mxu0
  %224 = vmatprep.mubr.bf16.mxu0 0
  %225 = vmatmul.mubr.bf16.gmra.mrb[0].mxu0 %v114
  %v226 = vpop.f32.mrb[0].mxu0
  %v227 = vadd.f32 0.0, %v226
  %v228 = vpop.f32.mrb[0].mxu0
  %v229 = vpop.f32.mrb[0].mxu0
  %v230 = vadd.f32 0.0, %v229
  %v231 = vpop.f32.mrb[0].mxu0
  %232 = vmatprep.mubr.bf16.mxu0 0
  %233 = vmatmul.mubr.bf16.gmra.mrb[0].mxu0 %v115
  %v234 = vpop.f32.mrb[0].mxu0
  %v235 = vadd.f32 0.0, %v234
  %v236 = vpop.f32.mrb[0].mxu0
  %v237 = vpop.f32.mrb[0].mxu0
  %v238 = vadd.f32 0.0, %v237
  %v239 = vpop.f32.mrb[0].mxu0
  %240 = vmatprep.mubr.bf16.mxu0 0
  %241 = vmatmul.mubr.bf16.gmra.mrb[0].mxu0 %v116
  %v242 = vpop.f32.mrb[0].mxu0
  %v243 = vadd.f32 0.0, %v242
  %v244 = vpop.f32.mrb[0].mxu0
  %v245 = vpop.f32.mrb[0].mxu0
  %v246 = vadd.f32 0.0, %v245
  %v247 = vpop.f32.mrb[0].mxu0
  %248 = vmatprep.mubr.bf16.mxu0 0
  %249 = vmatmul.mubr.bf16.gmra.mrb[0].mxu0 %v117
  %v250 = vpop.f32.mrb[0].mxu0
  %v251 = vadd.f32 0.0, %v250
  %v252 = vpop.f32.mrb[0].mxu0
  %v253 = vpop.f32.mrb[0].mxu0
  %v254 = vadd.f32 0.0, %v253
  %v255 = vpop.f32.mrb[0].mxu0
  %256 = vmatprep.mubr.bf16.mxu0 0
  %257 = vmatmul.mubr.bf16.gmra.mrb[0].mxu0 %v118
  %v258 = vpop.f32.mrb[0].mxu0
  %v259 = vadd.f32 0.0, %v258
  %v260 = vpop.f32.mrb[0].mxu0
  %v261 = vpop.f32.mrb[0].mxu0
  %v262 = vadd.f32 0.0, %v261
  %v263 = vpop.f32.mrb[0].mxu0
  %264 = vmatprep.mubr.bf16.mxu0 0
  %265 = vmatmul.mubr.bf16.gmra.mrb[0].mxu0 %v119
  %v266 = vpop.f32.mrb[0].mxu0
  %v267 = vadd.f32 0.0, %v266
  %v268 = vpop.f32.mrb[0].mxu0
  %v269 = vpop.f32.mrb[0].mxu0
  %v270 = vadd.f32 0.0, %v269
  %v271 = vpop.f32.mrb[0].mxu0
  %272 = vdwg.mxu0
  %v273 = vadd.f32 %v32, %v211
  %v274 = vadd.f32 %v33, %v214
  %v275 = vadd.f32 %v34, %v219
  %v276 = vadd.f32 %v35, %v222
  %v277 = vadd.f32 %v36, %v227
  %v278 = vadd.f32 %v37, %v230
  %v279 = vadd.f32 %v38, %v235
  %v280 = vadd.f32 %v39, %v238
  %v281 = vadd.f32 %v40, %v243
  %v282 = vadd.f32 %v41, %v246
  %v283 = vadd.f32 %v42, %v251
  %v284 = vadd.f32 %v43, %v254
  %v285 = vadd.f32 %v44, %v259
  %v286 = vadd.f32 %v45, %v262
  %v287 = vadd.f32 %v46, %v267
  %v288 = vadd.f32 %v47, %v270
  %289 = vst [vmem:[%s2] sm:$0xff] %v273
  %290 = vst [vmem:[%s2 + $0x8] sm:$0xff] %v274
  %291 = vst [vmem:[%s2 + $0x10] sm:$0xff] %v275
  %292 = vst [vmem:[%s2 + $0x18] sm:$0xff] %v276
  %293 = vst [vmem:[%s2 + $0x20] sm:$0xff] %v277
  %294 = vst [vmem:[%s2 + $0x28] sm:$0xff] %v278
  %295 = vst [vmem:[%s2 + $0x30] sm:$0xff] %v279
  %296 = vst [vmem:[%s2 + $0x38] sm:$0xff] %v280
  %297 = vst [vmem:[%s2 + $0x40] sm:$0xff] %v281
  %298 = vst [vmem:[%s2 + $0x48] sm:$0xff] %v282
  %299 = vst [vmem:[%s2 + $0x50] sm:$0xff] %v283
  %300 = vst [vmem:[%s2 + $0x58] sm:$0xff] %v284
  %301 = vst [vmem:[%s2 + $0x60] sm:$0xff] %v285
  %302 = vst [vmem:[%s2 + $0x68] sm:$0xff] %v286
  %303 = vst [vmem:[%s2 + $0x70] sm:$0xff] %v287
  %304 = vst [vmem:[%s2 + $0x78] sm:$0xff] %v288
  // Predicated region
  $region14: #{model_cliptqn_forward.2} parent=0 // pred_check
    %p305 = pneg %p12
  $region15: #{model_cliptqn_forward.2} parent=0 // pred_check_branch
    %307 = sbr.rel (%p305) target = $region17
  $region16: #{model_cliptqn_forward.2} parent=0 // pred_region
    %v308 = vld [vmem:[%s2] sm:$0xff]
    %v309 = vld [vmem:[%s2 + $0x8] sm:$0xff]
    %v310 = vld [vmem:[%s2 + $0x10] sm:$0xff]
    %v311 = vld [vmem:[%s2 + $0x18] sm:$0xff]
    %v312 = vld [vmem:[%s2 + $0x20] sm:$0xff]
    %v313 = vld [vmem:[%s2 + $0x28] sm:$0xff]
    %v314 = vld [vmem:[%s2 + $0x30] sm:$0xff]
    %v315 = vld [vmem:[%s2 + $0x38] sm:$0xff]
    %v316 = vld [vmem:[%s2 + $0x40] sm:$0xff]
    %v317 = vld [vmem:[%s2 + $0x48] sm:$0xff]
    %v318 = vld [vmem:[%s2 + $0x50] sm:$0xff]
    %v319 = vld [vmem:[%s2 + $0x58] sm:$0xff]
    %v320 = vld [vmem:[%s2 + $0x60] sm:$0xff]
    %v321 = vld [vmem:[%s2 + $0x68] sm:$0xff]
    %v322 = vld [vmem:[%s2 + $0x70] sm:$0xff]
    %v323 = vld [vmem:[%s2 + $0x78] sm:$0xff]
    %v324 = vmul.f32 %v308, %v308
    %v325 = vmul.f32 %v309, %v309
    %v326 = vmul.f32 %v310, %v310
    %v327 = vmul.f32 %v311, %v311
    %v328 = vmul.f32 %v312, %v312
    %v329 = vmul.f32 %v313, %v313
    %v330 = vmul.f32 %v314, %v314
    %v331 = vmul.f32 %v315, %v315
    %v332 = vmul.f32 %v316, %v316
    %v333 = vmul.f32 %v317, %v317
    %v334 = vmul.f32 %v318, %v318
    %v335 = vmul.f32 %v319, %v319
    %v336 = vmul.f32 %v320, %v320
    %v337 = vmul.f32 %v321, %v321
    %v338 = vmul.f32 %v322, %v322
    %v339 = vmul.f32 %v323, %v323
    %v340 = vadd.f32 %v324, %v325
    %v341 = vadd.f32 %v340, %v326
    %v342 = vadd.f32 %v341, %v327
    %v343 = vadd.f32 %v342, %v328
    %v344 = vadd.f32 %v343, %v329
    %v345 = vadd.f32 %v344, %v330
    %v346 = vadd.f32 %v345, %v331
    %v347 = vadd.f32 %v346, %v332
    %v348 = vadd.f32 %v347, %v333
    %v349 = vadd.f32 %v348, %v334
    %v350 = vadd.f32 %v349, %v335
    %v351 = vadd.f32 %v350, %v336
    %v352 = vadd.f32 %v351, %v337
    %v353 = vadd.f32 %v352, %v338
    %v354 = vadd.f32 %v353, %v339
    %v355 = vrot.slane %v354, 4
    %v356 = vadd.f32 %v354, %v355
    %v357 = vrot.slane %v356, 2
    %v358 = vadd.f32 %v356, %v357
    %v359 = vrot.slane %v358, 1
    %v360 = vadd.f32 %v358, %v359
    %v361 = vadd.f32 %v360, 1e-12
    %v362 = vrsqrt.pop %v361
    %v363 = vmul.f32 %v308, %v362
    %v364 = vmul.f32 %v309, %v362
    %v365 = vmul.f32 %v310, %v362
    %v366 = vmul.f32 %v311, %v362
    %v367 = vmul.f32 %v312, %v362
    %v368 = vmul.f32 %v313, %v362
    %v369 = vmul.f32 %v314, %v362
    %v370 = vmul.f32 %v315, %v362
    %v371 = vmul.f32 %v316, %v362
    %v372 = vmul.f32 %v317, %v362
    %v373 = vmul.f32 %v318, %v362
    %v374 = vmul.f32 %v319, %v362
    %v375 = vmul.f32 %v320, %v362
    %v376 = vmul.f32 %v321, %v362
    %v377 = vmul.f32 %v322, %v362
    %v378 = vmul.f32 %v323, %v362
    %379 = vst [vmem:[%s2] sm:$0xff] %v363
    %380 = vst [vmem:[%s2 + $0x8] sm:$0xff] %v364
    %381 = vst [vmem:[%s2 + $0x10] sm:$0xff] %v365
    %382 = vst [vmem:[%s2 + $0x18] sm:$0xff] %v366
    %383 = vst [vmem:[%s2 + $0x20] sm:$0xff] %v367
    %384 = vst [vmem:[%s2 + $0x28] sm:$0xff] %v368
    %385 = vst [vmem:[%s2 + $0x30] sm:$0xff] %v369
    %386 = vst [vmem:[%s2 + $0x38] sm:$0xff] %v370
    %387 = vst [vmem:[%s2 + $0x40] sm:$0xff] %v371
    %388 = vst [vmem:[%s2 + $0x48] sm:$0xff] %v372
    %389 = vst [vmem:[%s2 + $0x50] sm:$0xff] %v373
    %390 = vst [vmem:[%s2 + $0x58] sm:$0xff] %v374
    %391 = vst [vmem:[%s2 + $0x60] sm:$0xff] %v375
    %392 = vst [vmem:[%s2 + $0x68] sm:$0xff] %v376
    %393 = vst [vmem:[%s2 + $0x70] sm:$0xff] %v377
    %394 = vst [vmem:[%s2 + $0x78] sm:$0xff] %v378
  $region17: #{model_cliptqn_forward.2} parent=0 // pred_fallthru
    _
  // Predicated region
  $region18: #{model_cliptqn_forward.2} parent=0 // pred_check
    _
  $region19: #{model_cliptqn_forward.2} parent=0 // pred_check_branch
    %396 = sbr.rel (0) target = $region21
  $region20: #{model_cliptqn_forward.2} parent=0 // pred_region
    _
  $region21: #{model_cliptqn_forward.2} parent=0 // pred_fallthru
    _
  // Predicated region
  $region22: #{model_cliptqn_forward.2} parent=0 // pred_check
    _
  $region23: #{model_cliptqn_forward.2} parent=0 // pred_check_branch
    %398 = sbr.rel (0) target = $region25
  $region24: #{model_cliptqn_forward.2} parent=0 // pred_region
    _
  $region25: #{model_cliptqn_forward.2} parent=0 // pred_fallthru
    _

// kernel: model_cliptqn_forward.3
$region0: #{model_cliptqn_forward.3}
  #allocation0 [shape = 'u32[]', space=smem, size = 0x4, offset = 0x4, fixed_abs, tag = 'smem constant byte address 0x4 - core index']
  #allocation1 [shape = 'u32[144,128]{1,0:T(1,128)}', space=vmem, size = 0x12000, scoped, tag = 'internal scratch']
  #allocation2 [shape = 'f32[16,128]{1,0:T(8,128)}', space=vmem, size = 0x2000, scoped, tag = 'scratch operand']
  #allocation3 [shape = 'f32[1]{0:T(128)S(6)}', space=smem, size = 0x200, scoped, tag = 'scoped memory for model_cliptqn_forward.3']
  %s0 = inlined_call_operand.<no memory space> [shape: f32[1], index: 0, kind: input, shape index: {}]
  %s1 = inlined_call_operand.vmem [shape: bf16[16,1024], index: 1, kind: input, shape index: {}]
  %s2 = inlined_call_operand.vmem [shape: bf16[1024,128], index: 2, kind: input, shape index: {}]
  %s3 = inlined_call_operand.vmem [shape: f32[128,128], index: 3, kind: input, shape index: {}]
  %s4 = inlined_call_operand.vmem [shape: f32[16,128], index: 4, kind: output, shape index: {}]
  %s5 = sld [smem:[#allocation0]]
  $region34: #{model_cliptqn_forward.3} parent=0
    _
  %s7 = ssub.s32 1, %s5
  %s8 = scalar_select 0, %s7, %s5
  %9 = sst [smem:[#allocation3]] %s0
  // Predicated region
  $region2: #{model_cliptqn_forward.3} parent=0 // pred_check
    _
  $region3: #{model_cliptqn_forward.3} parent=0 // pred_check_branch
    %11 = sbr.rel (0) target = $region5
  $region4: #{model_cliptqn_forward.3} parent=0 // pred_region
    _
  $region5: #{model_cliptqn_forward.3} parent=0 // pred_fallthru
    _
  // Predicated region
  $region6: #{model_cliptqn_forward.3} parent=0 // pred_check
    _
  $region7: #{model_cliptqn_forward.3} parent=0 // pred_check_branch
    %13 = sbr.rel (0) target = $region9
  $region8: #{model_cliptqn_forward.3} parent=0 // pred_region
    _
  $region9: #{model_cliptqn_forward.3} parent=0 // pred_fallthru
    _
  // Predicated region
  $region10: #{model_cliptqn_forward.3} parent=0 // pred_check
    _
  $region11: #{model_cliptqn_forward.3} parent=0 // pred_check_branch
    %15 = sbr.rel (0) target = $region13
  $region12: #{model_cliptqn_forward.3} parent=0 // pred_region
    _
  $region13: #{model_cliptqn_forward.3} parent=0 // pred_fallthru
    _
  // Predicated region
  $region14: #{model_cliptqn_forward.3} parent=0 // pred_check
    _
  $region15: #{model_cliptqn_forward.3} parent=0 // pred_check_branch
    %17 = sbr.rel (0) target = $region17
  $region16: #{model_cliptqn_forward.3} parent=0 // pred_region
    _
  $region17: #{model_cliptqn_forward.3} parent=0 // pred_fallthru
    _
  %p19 = scmp.eq.s32.totalorder 0, 0
  // Predicated region
  $region18: #{model_cliptqn_forward.3} parent=0 // pred_check
    %p20 = pneg %p19
  $region19: #{model_cliptqn_forward.3} parent=0 // pred_check_branch
    %22 = sbr.rel (%p20) target = $region21
  $region20: #{model_cliptqn_forward.3} parent=0 // pred_region
    %23 = vst [vmem:[#allocation2] sm:$0xff] 0.0
    %24 = vst [vmem:[#allocation2 + $0x8] sm:$0xff] 0.0
  $region21: #{model_cliptqn_forward.3} parent=0 // pred_fallthru
    _
  %v25 = vld [vmem:[#allocation2] sm:$0xff]
  %v26 = vld [vmem:[#allocation2 + $0x8] sm:$0xff]
  %v27 = vld [vmem:[%s1] sm:$0xff]
  %v28 = vld [vmem:[%s1 + $0x8] sm:$0xff]
  %v29 = vld [vmem:[%s1 + $0x10] sm:$0xff]
  %v30 = vld [vmem:[%s1 + $0x18] sm:$0xff]
  %v31 = vld [vmem:[%s1 + $0x20] sm:$0xff]
  %v32 = vld [vmem:[%s1 + $0x28] sm:$0xff]
  %v33 = vld [vmem:[%s1 + $0x30] sm:$0xff]
  %v34 = vld [vmem:[%s1 + $0x38] sm:$0xff]
  %v35 = vld [vmem:[%s2] sm:$0xf]
  %v36 = vld [vmem:[%s2 + $0x4] sm:$0xf]
  %v37 = vld [vmem:[%s2 + $0x8] sm:$0xf]
  %v38 = vld [vmem:[%s2 + $0xc] sm:$0xf]
  %v39 = vld [vmem:[%s2 + $0x10] sm:$0xf]
  %v40 = vld [vmem:[%s2 + $0x14] sm:$0xf]
  %v41 = vld [vmem:[%s2 + $0x18] sm:$0xf]
  %v42 = vld [vmem:[%s2 + $0x1c] sm:$0xf]
  %v43 = vld [vmem:[%s2 + $0x20] sm:$0xf]
  %v44 = vld [vmem:[%s2 + $0x24] sm:$0xf]
  %v45 = vld [vmem:[%s2 + $0x28] sm:$0xf]
  %v46 = vld [vmem:[%s2 + $0x2c] sm:$0xf]
  %v47 = vld [vmem:[%s2 + $0x30] sm:$0xf]
  %v48 = vld [vmem:[%s2 + $0x34] sm:$0xf]
  %v49 = vld [vmem:[%s2 + $0x38] sm:$0xf]
  %v50 = vld [vmem:[%s2 + $0x3c] sm:$0xf]
  %v51 = vld [vmem:[%s2 + $0x40] sm:$0xf]
  %v52 = vld [vmem:[%s2 + $0x44] sm:$0xf]
  %v53 = vld [vmem:[%s2 + $0x48] sm:$0xf]
  %v54 = vld [vmem:[%s2 + $0x4c] sm:$0xf]
  %v55 = vld [vmem:[%s2 + $0x50] sm:$0xf]
  %v56 = vld [vmem:[%s2 + $0x54] sm:$0xf]
  %v57 = vld [vmem:[%s2 + $0x58] sm:$0xf]
  %v58 = vld [vmem:[%s2 + $0x5c] sm:$0xf]
  %v59 = vld [vmem:[%s2 + $0x60] sm:$0xf]
  %v60 = vld [vmem:[%s2 + $0x64] sm:$0xf]
  %v61 = vld [vmem:[%s2 + $0x68] sm:$0xf]
  %v62 = vld [vmem:[%s2 + $0x6c] sm:$0xf]
  %v63 = vld [vmem:[%s2 + $0x70] sm:$0xf]
  %v64 = vld [vmem:[%s2 + $0x74] sm:$0xf]
  %v65 = vld [vmem:[%s2 + $0x78] sm:$0xf]
  %v66 = vld [vmem:[%s2 + $0x7c] sm:$0xf]
  %v67 = vld [vmem:[%s2 + $0x80] sm:$0xf]
  %v68 = vld [vmem:[%s2 + $0x84] sm:$0xf]
  %v69 = vld [vmem:[%s2 + $0x88] sm:$0xf]
  %v70 = vld [vmem:[%s2 + $0x8c] sm:$0xf]
  %v71 = vld [vmem:[%s2 + $0x90] sm:$0xf]
  %v72 = vld [vmem:[%s2 + $0x94] sm:$0xf]
  %v73 = vld [vmem:[%s2 + $0x98] sm:$0xf]
  %v74 = vld [vmem:[%s2 + $0x9c] sm:$0xf]
  %v75 = vld [vmem:[%s2 + $0xa0] sm:$0xf]
  %v76 = vld [vmem:[%s2 + $0xa4] sm:$0xf]
  %v77 = vld [vmem:[%s2 + $0xa8] sm:$0xf]
  %v78 = vld [vmem:[%s2 + $0xac] sm:$0xf]
  %v79 = vld [vmem:[%s2 + $0xb0] sm:$0xf]
  %v80 = vld [vmem:[%s2 + $0xb4] sm:$0xf]
  %v81 = vld [vmem:[%s2 + $0xb8] sm:$0xf]
  %v82 = vld [vmem:[%s2 + $0xbc] sm:$0xf]
  %v83 = vld [vmem:[%s2 + $0xc0] sm:$0xf]
  %v84 = vld [vmem:[%s2 + $0xc4] sm:$0xf]
  %v85 = vld [vmem:[%s2 + $0xc8] sm:$0xf]
  %v86 = vld [vmem:[%s2 + $0xcc] sm:$0xf]
  %v87 = vld [vmem:[%s2 + $0xd0] sm:$0xf]
  %v88 = vld [vmem:[%s2 + $0xd4] sm:$0xf]
  %v89 = vld [vmem:[%s2 + $0xd8] sm:$0xf]
  %v90 = vld [vmem:[%s2 + $0xdc] sm:$0xf]
  %v91 = vld [vmem:[%s2 + $0xe0] sm:$0xf]
  %v92 = vld [vmem:[%s2 + $0xe4] sm:$0xf]
  %v93 = vld [vmem:[%s2 + $0xe8] sm:$0xf]
  %v94 = vld [vmem:[%s2 + $0xec] sm:$0xf]
  %v95 = vld [vmem:[%s2 + $0xf0] sm:$0xf]
  %v96 = vld [vmem:[%s2 + $0xf4] sm:$0xf]
  %v97 = vld [vmem:[%s2 + $0xf8] sm:$0xf]
  %v98 = vld [vmem:[%s2 + $0xfc] sm:$0xf]
  %v99 = vld [vmem:[%s2 + $0x100] sm:$0xf]
  %v100 = vld [vmem:[%s2 + $0x104] sm:$0xf]
  %v101 = vld [vmem:[%s2 + $0x108] sm:$0xf]
  %v102 = vld [vmem:[%s2 + $0x10c] sm:$0xf]
  %v103 = vld [vmem:[%s2 + $0x110] sm:$0xf]
  %v104 = vld [vmem:[%s2 + $0x114] sm:$0xf]
  %v105 = vld [vmem:[%s2 + $0x118] sm:$0xf]
  %v106 = vld [vmem:[%s2 + $0x11c] sm:$0xf]
  %v107 = vld [vmem:[%s2 + $0x120] sm:$0xf]
  %v108 = vld [vmem:[%s2 + $0x124] sm:$0xf]
  %v109 = vld [vmem:[%s2 + $0x128] sm:$0xf]
  %v110 = vld [vmem:[%s2 + $0x12c] sm:$0xf]
  %v111 = vld [vmem:[%s2 + $0x130] sm:$0xf]
  %v112 = vld [vmem:[%s2 + $0x134] sm:$0xf]
  %v113 = vld [vmem:[%s2 + $0x138] sm:$0xf]
  %v114 = vld [vmem:[%s2 + $0x13c] sm:$0xf]
  %v115 = vld [vmem:[%s2 + $0x140] sm:$0xf]
  %v116 = vld [vmem:[%s2 + $0x144] sm:$0xf]
  %v117 = vld [vmem:[%s2 + $0x148] sm:$0xf]
  %v118 = vld [vmem:[%s2 + $0x14c] sm:$0xf]
  %v119 = vld [vmem:[%s2 + $0x150] sm:$0xf]
  %v120 = vld [vmem:[%s2 + $0x154] sm:$0xf]
  %v121 = vld [vmem:[%s2 + $0x158] sm:$0xf]
  %v122 = vld [vmem:[%s2 + $0x15c] sm:$0xf]
  %v123 = vld [vmem:[%s2 + $0x160] sm:$0xf]
  %v124 = vld [vmem:[%s2 + $0x164] sm:$0xf]
  %v125 = vld [vmem:[%s2 + $0x168] sm:$0xf]
  %v126 = vld [vmem:[%s2 + $0x16c] sm:$0xf]
  %v127 = vld [vmem:[%s2 + $0x170] sm:$0xf]
  %v128 = vld [vmem:[%s2 + $0x174] sm:$0xf]
  %v129 = vld [vmem:[%s2 + $0x178] sm:$0xf]
  %v130 = vld [vmem:[%s2 + $0x17c] sm:$0xf]
  %v131 = vld [vmem:[%s2 + $0x180] sm:$0xf]
  %v132 = vld [vmem:[%s2 + $0x184] sm:$0xf]
  %v133 = vld [vmem:[%s2 + $0x188] sm:$0xf]
  %v134 = vld [vmem:[%s2 + $0x18c] sm:$0xf]
  %v135 = vld [vmem:[%s2 + $0x190] sm:$0xf]
  %v136 = vld [vmem:[%s2 + $0x194] sm:$0xf]
  %v137 = vld [vmem:[%s2 + $0x198] sm:$0xf]
  %v138 = vld [vmem:[%s2 + $0x19c] sm:$0xf]
  %v139 = vld [vmem:[%s2 + $0x1a0] sm:$0xf]
  %v140 = vld [vmem:[%s2 + $0x1a4] sm:$0xf]
  %v141 = vld [vmem:[%s2 + $0x1a8] sm:$0xf]
  %v142 = vld [vmem:[%s2 + $0x1ac] sm:$0xf]
  %v143 = vld [vmem:[%s2 + $0x1b0] sm:$0xf]
  %v144 = vld [vmem:[%s2 + $0x1b4] sm:$0xf]
  %v145 = vld [vmem:[%s2 + $0x1b8] sm:$0xf]
  %v146 = vld [vmem:[%s2 + $0x1bc] sm:$0xf]
  %v147 = vld [vmem:[%s2 + $0x1c0] sm:$0xf]
  %v148 = vld [vmem:[%s2 + $0x1c4] sm:$0xf]
  %v149 = vld [vmem:[%s2 + $0x1c8] sm:$0xf]
  %v150 = vld [vmem:[%s2 + $0x1cc] sm:$0xf]
  %v151 = vld [vmem:[%s2 + $0x1d0] sm:$0xf]
  %v152 = vld [vmem:[%s2 + $0x1d4] sm:$0xf]
  %v153 = vld [vmem:[%s2 + $0x1d8] sm:$0xf]
  %v154 = vld [vmem:[%s2 + $0x1dc] sm:$0xf]
  %v155 = vld [vmem:[%s2 + $0x1e0] sm:$0xf]
  %v156 = vld [vmem:[%s2 + $0x1e4] sm:$0xf]
  %v157 = vld [vmem:[%s2 + $0x1e8] sm:$0xf]
  %v158 = vld [vmem:[%s2 + $0x1ec] sm:$0xf]
  %v159 = vld [vmem:[%s2 + $0x1f0] sm:$0xf]
  %v160 = vld [vmem:[%s2 + $0x1f4] sm:$0xf]
  %v161 = vld [vmem:[%s2 + $0x1f8] sm:$0xf]
  %v162 = vld [vmem:[%s2 + $0x1fc] sm:$0xf]
  %v171 = vunpack.c.l.b16 %v27
  %v172 = vunpack.c.h.b16 %v27
  %v173 = vunpack.c.l.b16 %v28
  %v174 = vunpack.c.h.b16 %v28
  %v175 = vunpack.c.l.b16 %v29
  %v176 = vunpack.c.h.b16 %v29
  %v177 = vunpack.c.l.b16 %v30
  %v178 = vunpack.c.h.b16 %v30
  %v179 = vunpack.c.l.b16 %v31
  %v180 = vunpack.c.h.b16 %v31
  %v181 = vunpack.c.l.b16 %v32
  %v182 = vunpack.c.h.b16 %v32
  %v183 = vunpack.c.l.b16 %v33
  %v184 = vunpack.c.h.b16 %v33
  %v185 = vunpack.c.l.b16 %v34
  %v186 = vunpack.c.h.b16 %v34
  %v187 = vpack.c.b16 %v179, %v171
  %v188 = vpack.c.b16 %v180, %v172
  %v189 = vpack.c.b16 %v181, %v173
  %v190 = vpack.c.b16 %v182, %v174
  %v191 = vpack.c.b16 %v183, %v175
  %v192 = vpack.c.b16 %v184, %v176
  %v193 = vpack.c.b16 %v185, %v177
  %v194 = vpack.c.b16 %v186, %v178
  %v331 = vunpack.c.l.b16 %v35
  %v332 = vunpack.c.l.b16 %v36
  %v333 = vunpack.c.l.b16 %v37
  %v334 = vunpack.c.l.b16 %v38
  %v335 = vunpack.c.l.b16 %v39
  %v336 = vunpack.c.l.b16 %v40
  %v337 = vunpack.c.l.b16 %v41
  %v338 = vunpack.c.l.b16 %v42
  %v339 = vunpack.c.l.b16 %v43
  %v340 = vunpack.c.l.b16 %v44
  %v341 = vunpack.c.l.b16 %v45
  %v342 = vunpack.c.l.b16 %v46
  %v343 = vunpack.c.l.b16 %v47
  %v344 = vunpack.c.l.b16 %v48
  %v345 = vunpack.c.l.b16 %v49
  %v346 = vunpack.c.l.b16 %v50
  %v347 = vunpack.c.l.b16 %v51
  %v348 = vunpack.c.l.b16 %v52
  %v349 = vunpack.c.l.b16 %v53
  %v350 = vunpack.c.l.b16 %v54
  %v351 = vunpack.c.l.b16 %v55
  %v352 = vunpack.c.l.b16 %v56
  %v353 = vunpack.c.l.b16 %v57
  %v354 = vunpack.c.l.b16 %v58
  %v355 = vunpack.c.l.b16 %v59
  %v356 = vunpack.c.l.b16 %v60
  %v357 = vunpack.c.l.b16 %v61
  %v358 = vunpack.c.l.b16 %v62
  %v359 = vunpack.c.l.b16 %v63
  %v360 = vunpack.c.l.b16 %v64
  %v361 = vunpack.c.l.b16 %v65
  %v362 = vunpack.c.l.b16 %v66
  %v363 = vunpack.c.l.b16 %v67
  %v364 = vunpack.c.l.b16 %v68
  %v365 = vunpack.c.l.b16 %v69
  %v366 = vunpack.c.l.b16 %v70
  %v367 = vunpack.c.l.b16 %v71
  %v368 = vunpack.c.l.b16 %v72
  %v369 = vunpack.c.l.b16 %v73
  %v370 = vunpack.c.l.b16 %v74
  %v371 = vunpack.c.l.b16 %v75
  %v372 = vunpack.c.l.b16 %v76
  %v373 = vunpack.c.l.b16 %v77
  %v374 = vunpack.c.l.b16 %v78
  %v375 = vunpack.c.l.b16 %v79
  %v376 = vunpack.c.l.b16 %v80
  %v377 = vunpack.c.l.b16 %v81
  %v378 = vunpack.c.l.b16 %v82
  %v379 = vunpack.c.l.b16 %v83
  %v380 = vunpack.c.l.b16 %v84
  %v381 = vunpack.c.l.b16 %v85
  %v382 = vunpack.c.l.b16 %v86
  %v383 = vunpack.c.l.b16 %v87
  %v384 = vunpack.c.l.b16 %v88
  %v385 = vunpack.c.l.b16 %v89
  %v386 = vunpack.c.l.b16 %v90
  %v387 = vunpack.c.l.b16 %v91
  %v388 = vunpack.c.l.b16 %v92
  %v389 = vunpack.c.l.b16 %v93
  %v390 = vunpack.c.l.b16 %v94
  %v391 = vunpack.c.l.b16 %v95
  %v392 = vunpack.c.l.b16 %v96
  %v393 = vunpack.c.l.b16 %v97
  %v394 = vunpack.c.l.b16 %v98
  %v395 = vunpack.c.l.b16 %v99
  %v396 = vunpack.c.l.b16 %v100
  %v397 = vunpack.c.l.b16 %v101
  %v398 = vunpack.c.l.b16 %v102
  %v399 = vunpack.c.l.b16 %v103
  %v400 = vunpack.c.l.b16 %v104
  %v401 = vunpack.c.l.b16 %v105
  %v402 = vunpack.c.l.b16 %v106
  %v403 = vunpack.c.l.b16 %v107
  %v404 = vunpack.c.l.b16 %v108
  %v405 = vunpack.c.l.b16 %v109
  %v406 = vunpack.c.l.b16 %v110
  %v407 = vunpack.c.l.b16 %v111
  %v408 = vunpack.c.l.b16 %v112
  %v409 = vunpack.c.l.b16 %v113
  %v410 = vunpack.c.l.b16 %v114
  %v411 = vunpack.c.l.b16 %v115
  %v412 = vunpack.c.l.b16 %v116
  %v413 = vunpack.c.l.b16 %v117
  %v414 = vunpack.c.l.b16 %v118
  %v415 = vunpack.c.l.b16 %v119
  %v416 = vunpack.c.l.b16 %v120
  %v417 = vunpack.c.l.b16 %v121
  %v418 = vunpack.c.l.b16 %v122
  %v419 = vunpack.c.l.b16 %v123
  %v420 = vunpack.c.l.b16 %v124
  %v421 = vunpack.c.l.b16 %v125
  %v422 = vunpack.c.l.b16 %v126
  %v423 = vunpack.c.l.b16 %v127
  %v424 = vunpack.c.l.b16 %v128
  %v425 = vunpack.c.l.b16 %v129
  %v426 = vunpack.c.l.b16 %v130
  %v427 = vunpack.c.l.b16 %v131
  %v428 = vunpack.c.l.b16 %v132
  %v429 = vunpack.c.l.b16 %v133
  %v430 = vunpack.c.l.b16 %v134
  %v431 = vunpack.c.l.b16 %v135
  %v432 = vunpack.c.l.b16 %v136
  %v433 = vunpack.c.l.b16 %v137
  %v434 = vunpack.c.l.b16 %v138
  %v435 = vunpack.c.l.b16 %v139
  %v436 = vunpack.c.l.b16 %v140
  %v437 = vunpack.c.l.b16 %v141
  %v438 = vunpack.c.l.b16 %v142
  %v439 = vunpack.c.l.b16 %v143
  %v440 = vunpack.c.l.b16 %v144
  %v441 = vunpack.c.l.b16 %v145
  %v442 = vunpack.c.l.b16 %v146
  %v443 = vunpack.c.l.b16 %v147
  %v444 = vunpack.c.l.b16 %v148
  %v445 = vunpack.c.l.b16 %v149
  %v446 = vunpack.c.l.b16 %v150
  %v447 = vunpack.c.l.b16 %v151
  %v448 = vunpack.c.l.b16 %v152
  %v449 = vunpack.c.l.b16 %v153
  %v450 = vunpack.c.l.b16 %v154
  %v451 = vunpack.c.l.b16 %v155
  %v452 = vunpack.c.l.b16 %v156
  %v453 = vunpack.c.l.b16 %v157
  %v454 = vunpack.c.l.b16 %v158
  %v455 = vunpack.c.l.b16 %v159
  %v456 = vunpack.c.l.b16 %v160
  %v457 = vunpack.c.l.b16 %v161
  %v458 = vunpack.c.l.b16 %v162
  %v459 = vpack.c.b16 %v332, %v331
  %v460 = vpack.c.b16 %v334, %v333
  %v461 = vpack.c.b16 %v336, %v335
  %v462 = vpack.c.b16 %v338, %v337
  %v463 = vpack.c.b16 %v340, %v339
  %v464 = vpack.c.b16 %v342, %v341
  %v465 = vpack.c.b16 %v344, %v343
  %v466 = vpack.c.b16 %v346, %v345
  %v467 = vpack.c.b16 %v348, %v347
  %v468 = vpack.c.b16 %v350, %v349
  %v469 = vpack.c.b16 %v352, %v351
  %v470 = vpack.c.b16 %v354, %v353
  %v471 = vpack.c.b16 %v356, %v355
  %v472 = vpack.c.b16 %v358, %v357
  %v473 = vpack.c.b16 %v360, %v359
  %v474 = vpack.c.b16 %v362, %v361
  %v475 = vpack.c.b16 %v364, %v363
  %v476 = vpack.c.b16 %v366, %v365
  %v477 = vpack.c.b16 %v368, %v367
  %v478 = vpack.c.b16 %v370, %v369
  %v479 = vpack.c.b16 %v372, %v371
  %v480 = vpack.c.b16 %v374, %v373
  %v481 = vpack.c.b16 %v376, %v375
  %v482 = vpack.c.b16 %v378, %v377
  %v483 = vpack.c.b16 %v380, %v379
  %v484 = vpack.c.b16 %v382, %v381
  %v485 = vpack.c.b16 %v384, %v383
  %v486 = vpack.c.b16 %v386, %v385
  %v487 = vpack.c.b16 %v388, %v387
  %v488 = vpack.c.b16 %v390, %v389
  %v489 = vpack.c.b16 %v392, %v391
  %v490 = vpack.c.b16 %v394, %v393
  %v491 = vpack.c.b16 %v396, %v395
  %v492 = vpack.c.b16 %v398, %v397
  %v493 = vpack.c.b16 %v400, %v399
  %v494 = vpack.c.b16 %v402, %v401
  %v495 = vpack.c.b16 %v404, %v403
  %v496 = vpack.c.b16 %v406, %v405
  %v497 = vpack.c.b16 %v408, %v407
  %v498 = vpack.c.b16 %v410, %v409
  %v499 = vpack.c.b16 %v412, %v411
  %v500 = vpack.c.b16 %v414, %v413
  %v501 = vpack.c.b16 %v416, %v415
  %v502 = vpack.c.b16 %v418, %v417
  %v503 = vpack.c.b16 %v420, %v419
  %v504 = vpack.c.b16 %v422, %v421
  %v505 = vpack.c.b16 %v424, %v423
  %v506 = vpack.c.b16 %v426, %v425
  %v507 = vpack.c.b16 %v428, %v427
  %v508 = vpack.c.b16 %v430, %v429
  %v509 = vpack.c.b16 %v432, %v431
  %v510 = vpack.c.b16 %v434, %v433
  %v511 = vpack.c.b16 %v436, %v435
  %v512 = vpack.c.b16 %v438, %v437
  %v513 = vpack.c.b16 %v440, %v439
  %v514 = vpack.c.b16 %v442, %v441
  %v515 = vpack.c.b16 %v444, %v443
  %v516 = vpack.c.b16 %v446, %v445
  %v517 = vpack.c.b16 %v448, %v447
  %v518 = vpack.c.b16 %v450, %v449
  %v519 = vpack.c.b16 %v452, %v451
  %v520 = vpack.c.b16 %v454, %v453
  %v521 = vpack.c.b16 %v456, %v455
  %v522 = vpack.c.b16 %v458, %v457
  %587 = vmatprep.subr.bf16.mxu0 0
  %588 = vmatpush1.bf16.msra.mxu0 %v459
  %589 = vmatprep.subr.bf16.mxu0 0
  %590 = vmatpush1.bf16.msra.mxu0 %v460
  %591 = vmatprep.subr.bf16.mxu0 0
  %592 = vmatpush1.bf16.msra.mxu0 %v461
  %593 = vmatprep.subr.bf16.mxu0 0
  %594 = vmatpush1.bf16.msra.mxu0 %v462
  %595 = vmatprep.subr.bf16.mxu0 0
  %596 = vmatpush1.bf16.msra.mxu0 %v463
  %597 = vmatprep.subr.bf16.mxu0 0
  %598 = vmatpush1.bf16.msra.mxu0 %v464
  %599 = vmatprep.subr.bf16.mxu0 0
  %600 = vmatpush1.bf16.msra.mxu0 %v465
  %601 = vmatprep.subr.bf16.mxu0 0
  %602 = vmatpush1.bf16.msra.mxu0 %v466
  %603 = vmatprep.subr.bf16.mxu0 0
  %604 = vmatpush1.bf16.msra.mxu0 %v467
  %605 = vmatprep.subr.bf16.mxu0 0
  %606 = vmatpush1.bf16.msra.mxu0 %v468
  %607 = vmatprep.subr.bf16.mxu0 0
  %608 = vmatpush1.bf16.msra.mxu0 %v469
  %609 = vmatprep.subr.bf16.mxu0 0
  %610 = vmatpush1.bf16.msra.mxu0 %v470
  %611 = vmatprep.subr.bf16.mxu0 0
  %612 = vmatpush1.bf16.msra.mxu0 %v471
  %613 = vmatprep.subr.bf16.mxu0 0
  %614 = vmatpush1.bf16.msra.mxu0 %v472
  %615 = vmatprep.subr.bf16.mxu0 0
  %616 = vmatpush1.bf16.msra.mxu0 %v473
  %617 = vmatprep.subr.bf16.mxu0 0
  %618 = vmatpush1.bf16.msra.mxu0 %v474
  %619 = vmatprep.mubr.bf16.mxu0 %v188
  %620 = vmatmul.mubr.bf16.gmra.mrb[0].mxu0 %v187
  %v621 = vpop.f32.mrb[0].mxu0
  %v622 = vadd.f32 0.0, %v621
  %v623 = vpop.f32.mrb[0].mxu0
  %v624 = vpop.f32.mrb[0].mxu0
  %v625 = vadd.f32 0.0, %v624
  %v626 = vpop.f32.mrb[0].mxu0
  %627 = vdwg.mxu0
  %628 = vmatprep.subr.bf16.mxu0 0
  %629 = vmatpush1.bf16.msra.mxu0 %v475
  %630 = vmatprep.subr.bf16.mxu0 0
  %631 = vmatpush1.bf16.msra.mxu0 %v476
  %632 = vmatprep.subr.bf16.mxu0 0
  %633 = vmatpush1.bf16.msra.mxu0 %v477
  %634 = vmatprep.subr.bf16.mxu0 0
  %635 = vmatpush1.bf16.msra.mxu0 %v478
  %636 = vmatprep.subr.bf16.mxu0 0
  %637 = vmatpush1.bf16.msra.mxu0 %v479
  %638 = vmatprep.subr.bf16.mxu0 0
  %639 = vmatpush1.bf16.msra.mxu0 %v480
  %640 = vmatprep.subr.bf16.mxu0 0
  %641 = vmatpush1.bf16.msra.mxu0 %v481
  %642 = vmatprep.subr.bf16.mxu0 0
  %643 = vmatpush1.bf16.msra.mxu0 %v482
  %644 = vmatprep.subr.bf16.mxu0 0
  %645 = vmatpush1.bf16.msra.mxu0 %v483
  %646 = vmatprep.subr.bf16.mxu0 0
  %647 = vmatpush1.bf16.msra.mxu0 %v484
  %648 = vmatprep.subr.bf16.mxu0 0
  %649 = vmatpush1.bf16.msra.mxu0 %v485
  %650 = vmatprep.subr.bf16.mxu0 0
  %651 = vmatpush1.bf16.msra.mxu0 %v486
  %652 = vmatprep.subr.bf16.mxu0 0
  %653 = vmatpush1.bf16.msra.mxu0 %v487
  %654 = vmatprep.subr.bf16.mxu0 0
  %655 = vmatpush1.bf16.msra.mxu0 %v488
  %656 = vmatprep.subr.bf16.mxu0 0
  %657 = vmatpush1.bf16.msra.mxu0 %v489
  %658 = vmatprep.subr.bf16.mxu0 0
  %659 = vmatpush1.bf16.msra.mxu0 %v490
  %660 = vmatprep.mubr.bf16.mxu0 %v190
  %661 = vmatmul.mubr.bf16.gmra.mrb[0].mxu0 %v189
  %v662 = vpop.f32.mrb[0].mxu0
  %v663 = vadd.f32 %v622, %v662
  %v664 = vpop.f32.mrb[0].mxu0
  %v665 = vpop.f32.mrb[0].mxu0
  %v666 = vadd.f32 %v625, %v665
  %v667 = vpop.f32.mrb[0].mxu0
  %668 = vdwg.mxu0
  %669 = vmatprep.subr.bf16.mxu0 0
  %670 = vmatpush1.bf16.msra.mxu0 %v491
  %671 = vmatprep.subr.bf16.mxu0 0
  %672 = vmatpush1.bf16.msra.mxu0 %v492
  %673 = vmatprep.subr.bf16.mxu0 0
  %674 = vmatpush1.bf16.msra.mxu0 %v493
  %675 = vmatprep.subr.bf16.mxu0 0
  %676 = vmatpush1.bf16.msra.mxu0 %v494
  %677 = vmatprep.subr.bf16.mxu0 0
  %678 = vmatpush1.bf16.msra.mxu0 %v495
  %679 = vmatprep.subr.bf16.mxu0 0
  %680 = vmatpush1.bf16.msra.mxu0 %v496
  %681 = vmatprep.subr.bf16.mxu0 0
  %682 = vmatpush1.bf16.msra.mxu0 %v497
  %683 = vmatprep.subr.bf16.mxu0 0
  %684 = vmatpush1.bf16.msra.mxu0 %v498
  %685 = vmatprep.subr.bf16.mxu0 0
  %686 = vmatpush1.bf16.msra.mxu0 %v499
  %687 = vmatprep.subr.bf16.mxu0 0
  %688 = vmatpush1.bf16.msra.mxu0 %v500
  %689 = vmatprep.subr.bf16.mxu0 0
  %690 = vmatpush1.bf16.msra.mxu0 %v501
  %691 = vmatprep.subr.bf16.mxu0 0
  %692 = vmatpush1.bf16.msra.mxu0 %v502
  %693 = vmatprep.subr.bf16.mxu0 0
  %694 = vmatpush1.bf16.msra.mxu0 %v503
  %695 = vmatprep.subr.bf16.mxu0 0
  %696 = vmatpush1.bf16.msra.mxu0 %v504
  %697 = vmatprep.subr.bf16.mxu0 0
  %698 = vmatpush1.bf16.msra.mxu0 %v505
  %699 = vmatprep.subr.bf16.mxu0 0
  %700 = vmatpush1.bf16.msra.mxu0 %v506
  %701 = vmatprep.mubr.bf16.mxu0 %v192
  %702 = vmatmul.mubr.bf16.gmra.mrb[0].mxu0 %v191
  %v703 = vpop.f32.mrb[0].mxu0
  %v704 = vadd.f32 %v663, %v703
  %v705 = vpop.f32.mrb[0].mxu0
  %v706 = vpop.f32.mrb[0].mxu0
  %v707 = vadd.f32 %v666, %v706
  %v708 = vpop.f32.mrb[0].mxu0
  %709 = vdwg.mxu0
  %710 = vmatprep.subr.bf16.mxu0 0
  %711 = vmatpush1.bf16.msra.mxu0 %v507
  %712 = vmatprep.subr.bf16.mxu0 0
  %713 = vmatpush1.bf16.msra.mxu0 %v508
  %714 = vmatprep.subr.bf16.mxu0 0
  %715 = vmatpush1.bf16.msra.mxu0 %v509
  %716 = vmatprep.subr.bf16.mxu0 0
  %717 = vmatpush1.bf16.msra.mxu0 %v510
  %718 = vmatprep.subr.bf16.mxu0 0
  %719 = vmatpush1.bf16.msra.mxu0 %v511
  %720 = vmatprep.subr.bf16.mxu0 0
  %721 = vmatpush1.bf16.msra.mxu0 %v512
  %722 = vmatprep.subr.bf16.mxu0 0
  %723 = vmatpush1.bf16.msra.mxu0 %v513
  %724 = vmatprep.subr.bf16.mxu0 0
  %725 = vmatpush1.bf16.msra.mxu0 %v514
  %726 = vmatprep.subr.bf16.mxu0 0
  %727 = vmatpush1.bf16.msra.mxu0 %v515
  %728 = vmatprep.subr.bf16.mxu0 0
  %729 = vmatpush1.bf16.msra.mxu0 %v516
  %730 = vmatprep.subr.bf16.mxu0 0
  %731 = vmatpush1.bf16.msra.mxu0 %v517
  %732 = vmatprep.subr.bf16.mxu0 0
  %733 = vmatpush1.bf16.msra.mxu0 %v518
  %734 = vmatprep.subr.bf16.mxu0 0
  %735 = vmatpush1.bf16.msra.mxu0 %v519
  %736 = vmatprep.subr.bf16.mxu0 0
  %737 = vmatpush1.bf16.msra.mxu0 %v520
  %738 = vmatprep.subr.bf16.mxu0 0
  %739 = vmatpush1.bf16.msra.mxu0 %v521
  %740 = vmatprep.subr.bf16.mxu0 0
  %741 = vmatpush1.bf16.msra.mxu0 %v522
  %742 = vmatprep.mubr.bf16.mxu0 %v194
  %743 = vmatmul.mubr.bf16.gmra.mrb[0].mxu0 %v193
  %v744 = vpop.f32.mrb[0].mxu0
  %v745 = vadd.f32 %v704, %v744
  %v746 = vpop.f32.mrb[0].mxu0
  %v747 = vpop.f32.mrb[0].mxu0
  %v748 = vadd.f32 %v707, %v747
  %v749 = vpop.f32.mrb[0].mxu0
  %750 = vdwg.mxu0
  %v751 = vadd.f32 %v25, %v745
  %v752 = vadd.f32 %v26, %v748
  %753 = vst [vmem:[#allocation2] sm:$0xff] %v751
  %754 = vst [vmem:[#allocation2 + $0x8] sm:$0xff] %v752
  // Predicated region
  $region22: #{model_cliptqn_forward.3} parent=0 // pred_check
    %p755 = pneg %p19
  $region23: #{model_cliptqn_forward.3} parent=0 // pred_check_branch
    %757 = sbr.rel (%p755) target = $region25
  $region24: #{model_cliptqn_forward.3} parent=0 // pred_region
    %v758 = vld [vmem:[#allocation2] sm:$0xff]
    %v759 = vld [vmem:[#allocation2 + $0x8] sm:$0xff]
    %v760 = vmul.f32 %v758, %v758
    %v761 = vmul.f32 %v759, %v759
    %762 = vadd.xlane.f32.xlu0 %v760
    %v763 = vpop.xlane.xlu0 %762
    %764 = vadd.xlane.f32.xlu0 %v761
    %v765 = vpop.xlane.xlu0 %764
    %v766 = vadd.f32 %v763, 1e-12
    %v767 = vadd.f32 %v765, 1e-12
    %v768 = vrsqrt.pop %v766
    %v769 = vrsqrt.pop %v767
    %s770 = sld [smem:[#allocation3]]
    %v771 = vstv %s770
    %v772 = vmul.f32 %v768, %v771
    %v773 = vmul.f32 %v769, %v771
    %v774 = vmul.f32 %v758, %v772
    %v775 = vmul.f32 %v759, %v773
    %v776 = vld [vmem:[%s3] sm:$0xff]
    %v777 = vld [vmem:[%s3 + $0x8] sm:$0xff]
    %v778 = vld [vmem:[%s3 + $0x10] sm:$0xff]
    %v779 = vld [vmem:[%s3 + $0x18] sm:$0xff]
    %v780 = vld [vmem:[%s3 + $0x20] sm:$0xff]
    %v781 = vld [vmem:[%s3 + $0x28] sm:$0xff]
    %v782 = vld [vmem:[%s3 + $0x30] sm:$0xff]
    %v783 = vld [vmem:[%s3 + $0x38] sm:$0xff]
    %v784 = vld [vmem:[%s3 + $0x40] sm:$0xff]
    %v785 = vld [vmem:[%s3 + $0x48] sm:$0xff]
    %v786 = vld [vmem:[%s3 + $0x50] sm:$0xff]
    %v787 = vld [vmem:[%s3 + $0x58] sm:$0xff]
    %v788 = vld [vmem:[%s3 + $0x60] sm:$0xff]
    %v789 = vld [vmem:[%s3 + $0x68] sm:$0xff]
    %v790 = vld [vmem:[%s3 + $0x70] sm:$0xff]
    %v791 = vld [vmem:[%s3 + $0x78] sm:$0xff]
    %792 = vmatprep.subr.mxu0 0.0
    %793 = vmatpush1.msra.mxu0 %v776
    %794 = vmatprep.subr.mxu0 0.0
    %795 = vmatpush1.msra.mxu0 %v777
    %796 = vmatprep.subr.mxu0 0.0
    %797 = vmatpush1.msra.mxu0 %v778
    %798 = vmatprep.subr.mxu0 0.0
    %799 = vmatpush1.msra.mxu0 %v779
    %800 = vmatprep.subr.mxu0 0.0
    %801 = vmatpush1.msra.mxu0 %v780
    %802 = vmatprep.subr.mxu0 0.0
    %803 = vmatpush1.msra.mxu0 %v781
    %804 = vmatprep.subr.mxu0 0.0
    %805 = vmatpush1.msra.mxu0 %v782
    %806 = vmatprep.subr.mxu0 0.0
    %807 = vmatpush1.msra.mxu0 %v783
    %808 = vmatprep.subr.mxu0 0.0
    %809 = vmatpush1.msra.mxu0 %v784
    %810 = vmatprep.subr.mxu0 0.0
    %811 = vmatpush1.msra.mxu0 %v785
    %812 = vmatprep.subr.mxu0 0.0
    %813 = vmatpush1.msra.mxu0 %v786
    %814 = vmatprep.subr.mxu0 0.0
    %815 = vmatpush1.msra.mxu0 %v787
    %816 = vmatprep.subr.mxu0 0.0
    %817 = vmatpush1.msra.mxu0 %v788
    %818 = vmatprep.subr.mxu0 0.0
    %819 = vmatpush1.msra.mxu0 %v789
    %820 = vmatprep.subr.mxu0 0.0
    %821 = vmatpush1.msra.mxu0 %v790
    %822 = vmatprep.subr.mxu0 0.0
    %823 = vmatpush1.msra.mxu0 %v791
    %824 = vmatprep.subr.mxu0 0.0
    %825 = vmatpush1.msra.mxu0 0.0
    %826 = vmatprep.subr.mxu0 0.0
    %827 = vmatpush1.msra.mxu0 0.0
    %828 = vmatprep.subr.mxu0 0.0
    %829 = vmatpush1.msra.mxu0 0.0
    %830 = vmatprep.subr.mxu0 0.0
    %831 = vmatpush1.msra.mxu0 0.0
    %832 = vmatprep.subr.mxu0 0.0
    %833 = vmatpush1.msra.mxu0 0.0
    %834 = vmatprep.subr.mxu0 0.0
    %835 = vmatpush1.msra.mxu0 0.0
    %836 = vmatprep.subr.mxu0 0.0
    %837 = vmatpush1.msra.mxu0 0.0
    %838 = vmatprep.subr.mxu0 0.0
    %839 = vmatpush1.msra.mxu0 0.0
    %840 = vmatprep.subr.mxu0 0.0
    %841 = vmatpush1.msra.mxu0 0.0
    %842 = vmatprep.subr.mxu0 0.0
    %843 = vmatpush1.msra.mxu0 0.0
    %844 = vmatprep.subr.mxu0 0.0
    %845 = vmatpush1.msra.mxu0 0.0
    %846 = vmatprep.subr.mxu0 0.0
    %847 = vmatpush1.msra.mxu0 0.0
    %848 = vmatprep.subr.mxu0 0.0
    %849 = vmatpush1.msra.mxu0 0.0
    %850 = vmatprep.subr.mxu0 0.0
    %851 = vmatpush1.msra.mxu0 0.0
    %852 = vmatprep.subr.mxu0 0.0
    %853 = vmatpush1.msra.mxu0 0.0
    %854 = vmatprep.subr.mxu0 0.0
    %855 = vmatpush1.msra.mxu0 0.0
    %856 = vmatprep.mubr.f32.mxu0 0.0
    %857 = vmatmul.mubr.f32.gmra.mrb[0].mxu0 %v774
    %v858 = vpop.f32.mrb[0].mxu0
    %v859 = vadd.f32 0.0, %v858
    %v860 = vpop.f32.mrb[0].mxu0
    %861 = vmatprep.mubr.f32.mxu0 0.0
    %862 = vmatmul.mubr.f32.gmra.mrb[0].mxu0 %v775
    %v863 = vpop.f32.mrb[0].mxu0
    %v864 = vadd.f32 0.0, %v863
    %v865 = vpop.f32.mrb[0].mxu0
    %866 = vdwg.mxu0
    %867 = vst [vmem:[%s4] sm:$0xff] %v859
    %868 = vst [vmem:[%s4 + $0x8] sm:$0xff] %v864
  $region25: #{model_cliptqn_forward.3} parent=0 // pred_fallthru
    _
  // Predicated region
  $region26: #{model_cliptqn_forward.3} parent=0 // pred_check
    _
  $region27: #{model_cliptqn_forward.3} parent=0 // pred_check_branch
    %870 = sbr.rel (0) target = $region29
  $region28: #{model_cliptqn_forward.3} parent=0 // pred_region
    _
  $region29: #{model_cliptqn_forward.3} parent=0 // pred_fallthru
    _
  // Predicated region
  $region30: #{model_cliptqn_forward.3} parent=0 // pred_check
    _
  $region31: #{model_cliptqn_forward.3} parent=0 // pred_check_branch
    %872 = sbr.rel (0) target = $region33
  $region32: #{model_cliptqn_forward.3} parent=0 // pred_region
    _
  $region33: #{model_cliptqn_forward.3} parent=0 // pred_fallthru
    _

</llo_original>
